<compile_context>
chip_gen: v6e
topology: v6e:2x2x1
jax: 0.10.0
libtpu: 0.0.40
codegen_flags: <defaults>
</compile_context>

<pallas_src>
import jax
import jax.numpy as jnp
from jax.experimental import pallas as pl
from jax.experimental.pallas import tpu as pltpu

HIDDEN = 64          # logical hidden width of the PyTorch module
BATCH_ALIGN = 16     # batch rows aligned for bf16 sublane packing (also satisfies the 8-rule)
MIN_SPLIT = 128      # once batch >= 2*MIN_SPLIT, force >=2 grid steps (v7x 2-TC sharding)


def _round_up(n, m):
    return ((n + m - 1) // m) * m


# ---------------------------------------------------------------------------
# Kernel: whole 3-layer MLP fused in VMEM for one batch tile.
#   x tile (tile_b, S) bf16 | w1 (S,64) bf16, b1 (1,64) f32
#                           | w2 (64,64) bf16, b2 (1,64) f32
#                           | w3 (64,A) bf16, b3 (1,A) f32 | out (tile_b, A) f32
# bf16 MXU operands with f32 accumulation; bias add / ReLU stay f32 on the VPU
# (v5e-safe).  Mosaic pads the small K/N dims to MXU tiles internally.
# ---------------------------------------------------------------------------
def qnetwork_kernel(x_ref, w1_ref, b1_ref, w2_ref, b2_ref, w3_ref, b3_ref, o_ref):
    x = x_ref[...]                                                     # bf16
    h1 = jnp.dot(x, w1_ref[...], preferred_element_type=jnp.float32) + b1_ref[...]
    h1 = jnp.maximum(h1, 0.0)
    h2 = jnp.dot(h1.astype(jnp.bfloat16), w2_ref[...],
                 preferred_element_type=jnp.float32) + b2_ref[...]
    h2 = jnp.maximum(h2, 0.0)
    out = jnp.dot(h2.astype(jnp.bfloat16), w3_ref[...],
                  preferred_element_type=jnp.float32) + b3_ref[...]
    o_ref[...] = out.astype(o_ref.dtype)                               # f32, real action width


# ---------------------------------------------------------------------------
# Parameter init (PyTorch-style uniform, stored as (in, out)).
# ---------------------------------------------------------------------------
def init_params(key, state_size, action_size, hidden=HIDDEN):
    ks = jax.random.split(key, 6)

    def linear(kw, kb, fan_in, fan_out):
        bound = 1.0 / jnp.sqrt(jnp.float32(fan_in))
        w = jax.random.uniform(kw, (fan_in, fan_out), jnp.float32, -bound, bound)
        b = jax.random.uniform(kb, (1, fan_out), jnp.float32, -bound, bound)
        return w, b

    w1, b1 = linear(ks[0], ks[1], state_size, hidden)
    w2, b2 = linear(ks[2], ks[3], hidden, hidden)
    w3, b3 = linear(ks[4], ks[5], hidden, action_size)
    return {"w1": w1, "b1": b1, "w2": w2, "b2": b2, "w3": w3, "b3": b3}


def prep_params(params):
    """Kernel-side layouts: weights bf16 (halves the resident-weight DMA), biases
    f32.  No feature padding — every weight/bias is a full-array resident block,
    which the (8,128)-or-full-dim rule allows regardless of logical sizes."""
    return {k: (v.astype(jnp.bfloat16) if k.startswith("w") else v)
            for k, v in params.items()}


# ---------------------------------------------------------------------------
# Forward wrapper: batch grid, weights resident in VMEM, unpadded lane widths.
# ---------------------------------------------------------------------------
def qnetwork_forward(x, kparams, state_size, action_size, max_tile_b=1024):
    w1, b1 = kparams["w1"], kparams["b1"]
    w2, b2 = kparams["w2"], kparams["b2"]
    w3, b3 = kparams["w3"], kparams["b3"]
    hidden = w1.shape[1]

    batch = x.shape[0]
    batch_r = _round_up(batch, BATCH_ALIGN)

    # Grid: enough tiles to respect max_tile_b; force >=2 tiles once the batch
    # is big enough that splitting keeps both v7x TensorCores busy; tiles divide
    # the rounded batch ~evenly so we never burn a near-empty tail tile.
    num_tiles = max(1, pl.cdiv(batch_r, max_tile_b))
    if batch_r >= 2 * MIN_SPLIT:
        num_tiles = max(num_tiles, 2)
    tile_b = _round_up(pl.cdiv(batch_r, num_tiles), BATCH_ALIGN)
    b_pad = tile_b * num_tiles
    grid = (num_tiles,)

    # x: bf16, real feature width, batch rows zero-padded to the tile multiple.
    x_p = jnp.pad(x.astype(jnp.bfloat16), ((0, b_pad - batch), (0, 0)))

    # Cost hint from *logical* dims.
    flops = 2 * batch * (state_size * hidden + hidden * hidden + hidden * action_size)
    bytes_accessed = (
        x_p.size * x_p.dtype.itemsize
        + sum(int(p.size) * p.dtype.itemsize for p in (w1, b1, w2, b2, w3, b3))
        + b_pad * action_size * 4
    )
    cost = pl.CostEstimate(flops=int(flops), transcendentals=0,
                           bytes_accessed=int(bytes_accessed))

    def run(single_buffer_weights):
        def resident(a):
            def idx(i):
                return (0, 0)
            if single_buffer_weights:
                # Constant index_map -> nothing to double-buffer; trims the
                # redundant second VMEM buffer for each of the 6 pinned operands.
                return pl.BlockSpec(a.shape, idx, pipeline_mode=pl.Buffered(1))
            return pl.BlockSpec(a.shape, idx)

        return pl.pallas_call(
            qnetwork_kernel,
            out_shape=jax.ShapeDtypeStruct((b_pad, action_size), jnp.float32),
            grid_spec=pltpu.PrefetchScalarGridSpec(
                num_scalar_prefetch=0,
                grid=grid,
                in_specs=[
                    pl.BlockSpec((tile_b, state_size), lambda i: (i, 0)),  # x: tiled over batch
                    resident(w1), resident(b1),                            # weights pinned in VMEM
                    resident(w2), resident(b2),
                    resident(w3), resident(b3),
                ],
                out_specs=pl.BlockSpec((tile_b, action_size), lambda i: (i, 0)),
            ),
            compiler_params=pltpu.CompilerParams(
                dimension_semantics=("parallel",),   # shard batch grid across TCs on v7x
            ),
            cost_estimate=cost,
        )(x_p, w1, b1, w2, b2, w3, b3)

    try:
        out_padded = run(True)
    except Exception:
        # pipeline_mode=pl.Buffered(1) not supported in this build: fall back to
        # default double-buffered resident blocks (semantics identical).
        out_padded = run(False)

    # Slice away batch-row padding (pure layout plumbing in the wrapper).
    return out_padded[:batch, :]


# ---------------------------------------------------------------------------
# References
# ---------------------------------------------------------------------------
def qnetwork_reference_f32(x, p):
    h1 = jnp.maximum(x @ p["w1"] + p["b1"], 0.0)
    h2 = jnp.maximum(h1 @ p["w2"] + p["b2"], 0.0)
    return h2 @ p["w3"] + p["b3"]


def qnetwork_reference_bf16(x, p):
    """Matches the kernel's precision policy (bf16 operands, f32 accumulate)."""
    bf = jnp.bfloat16
    h1 = jnp.maximum(jnp.dot(x.astype(bf), p["w1"].astype(bf),
                             preferred_element_type=jnp.float32) + p["b1"], 0.0)
    h2 = jnp.maximum(jnp.dot(h1.astype(bf), p["w2"].astype(bf),
                             preferred_element_type=jnp.float32) + p["b2"], 0.0)
    return jnp.dot(h2.astype(bf), p["w3"].astype(bf),
                   preferred_element_type=jnp.float32) + p["b3"]


if __name__ == "__main__":
    key = jax.random.PRNGKey(0)
    k_x, k_p = jax.random.split(key)

    batch, state_size, action_size = 8, 16, 4
    x = jax.random.normal(k_x, (batch, state_size), jnp.float32)

    params = init_params(k_p, state_size, action_size)
    kparams = prep_params(params)          # cast once, reuse every call

    out = qnetwork_forward(x, kparams, state_size, action_size)
    out = jax.block_until_ready(out)
    assert out.shape == (batch, action_size)

    ref_bf16 = qnetwork_reference_bf16(x, params)
    ref_f32 = qnetwork_reference_f32(x, params)
    assert jnp.allclose(out, ref_bf16, atol=1e-3, rtol=1e-3), "mismatch vs bf16-matched reference"
    assert jnp.allclose(out, ref_f32, atol=5e-2, rtol=5e-2), "mismatch vs f32 reference"

    print("KERNEL_OK")
</pallas_src>

<mosaic_0001>
module attributes {stable_mosaic.version = 11 : i64} {
  func.func @qnetwork_kernel(%arg0: i32, %arg1: memref<16x16xbf16, #tpu.memory_space<vmem>>, %arg2: memref<16x64xbf16, #tpu.memory_space<vmem>>, %arg3: memref<1x64xf32, #tpu.memory_space<vmem>>, %arg4: memref<64x64xbf16, #tpu.memory_space<vmem>>, %arg5: memref<1x64xf32, #tpu.memory_space<vmem>>, %arg6: memref<64x4xbf16, #tpu.memory_space<vmem>>, %arg7: memref<1x4xf32, #tpu.memory_space<vmem>>, %arg8: memref<16x4xf32, #tpu.memory_space<vmem>>) attributes {dimension_semantics = [#tpu.dimension_semantics<parallel>], iteration_bounds = array<i64: 1>, scalar_prefetch = 0 : i64, scratch_operands = 0 : i64, tpu.core_type = #tpu.core_type<tc>, window_params = [{transform_indices = @transform_0, window_bounds = array<i64: 16, 16>}, {pipeline_mode = #tpu.pipeline_mode<synchronous>, transform_indices = @transform_1, window_bounds = array<i64: 16, 64>}, {pipeline_mode = #tpu.pipeline_mode<synchronous>, transform_indices = @transform_2, window_bounds = array<i64: 1, 64>}, {pipeline_mode = #tpu.pipeline_mode<synchronous>, transform_indices = @transform_3, window_bounds = array<i64: 64, 64>}, {pipeline_mode = #tpu.pipeline_mode<synchronous>, transform_indices = @transform_4, window_bounds = array<i64: 1, 64>}, {pipeline_mode = #tpu.pipeline_mode<synchronous>, transform_indices = @transform_5, window_bounds = array<i64: 64, 4>}, {pipeline_mode = #tpu.pipeline_mode<synchronous>, transform_indices = @transform_6, window_bounds = array<i64: 1, 4>}, {transform_indices = @transform_7, window_bounds = array<i64: 16, 4>}]} {
    %c0 = arith.constant 0 : index
    %c0_0 = arith.constant 0 : index
    %0 = vector.load %arg1[%c0, %c0_0] : memref<16x16xbf16, #tpu.memory_space<vmem>>, vector<16x16xbf16>
    %c0_1 = arith.constant 0 : index
    %c0_2 = arith.constant 0 : index
    %1 = vector.load %arg2[%c0_1, %c0_2] : memref<16x64xbf16, #tpu.memory_space<vmem>>, vector<16x64xbf16>
    %cst = arith.constant dense<0.000000e+00> : vector<16x64xf32>
    %2 = tpu.matmul %0, %1, %cst {dimension_numbers = #tpu.dot_dimension_numbers<[1], [0], [0], [1], [0, 0, 1, 1], [], []>} : vector<16x16xbf16>, vector<16x64xbf16>, vector<16x64xf32> -> vector<16x64xf32>
    %c0_3 = arith.constant 0 : index
    %c0_4 = arith.constant 0 : index
    %3 = vector.load %arg3[%c0_3, %c0_4] : memref<1x64xf32, #tpu.memory_space<vmem>>, vector<1x64xf32>
    %4 = vector.broadcast %3 : vector<1x64xf32> to vector<16x64xf32>
    %5 = arith.addf %2, %4 : vector<16x64xf32>
    %cst_5 = arith.constant 0.000000e+00 : f32
    %6 = vector.broadcast %cst_5 : f32 to vector<16x64xf32>
    %7 = arith.maximumf %5, %6 : vector<16x64xf32>
    %8 = arith.truncf %7 : vector<16x64xf32> to vector<16x64xbf16>
    %c0_6 = arith.constant 0 : index
    %c0_7 = arith.constant 0 : index
    %9 = vector.load %arg4[%c0_6, %c0_7] : memref<64x64xbf16, #tpu.memory_space<vmem>>, vector<64x64xbf16>
    %cst_8 = arith.constant dense<0.000000e+00> : vector<16x64xf32>
    %10 = tpu.matmul %8, %9, %cst_8 {dimension_numbers = #tpu.dot_dimension_numbers<[1], [0], [0], [1], [0, 0, 1, 1], [], []>} : vector<16x64xbf16>, vector<64x64xbf16>, vector<16x64xf32> -> vector<16x64xf32>
    %c0_9 = arith.constant 0 : index
    %c0_10 = arith.constant 0 : index
    %11 = vector.load %arg5[%c0_9, %c0_10] : memref<1x64xf32, #tpu.memory_space<vmem>>, vector<1x64xf32>
    %12 = vector.broadcast %11 : vector<1x64xf32> to vector<16x64xf32>
    %13 = arith.addf %10, %12 : vector<16x64xf32>
    %cst_11 = arith.constant 0.000000e+00 : f32
    %14 = vector.broadcast %cst_11 : f32 to vector<16x64xf32>
    %15 = arith.maximumf %13, %14 : vector<16x64xf32>
    %16 = arith.truncf %15 : vector<16x64xf32> to vector<16x64xbf16>
    %c0_12 = arith.constant 0 : index
    %c0_13 = arith.constant 0 : index
    %17 = vector.load %arg6[%c0_12, %c0_13] : memref<64x4xbf16, #tpu.memory_space<vmem>>, vector<64x4xbf16>
    %cst_14 = arith.constant dense<0.000000e+00> : vector<16x4xf32>
    %18 = tpu.matmul %16, %17, %cst_14 {dimension_numbers = #tpu.dot_dimension_numbers<[1], [0], [0], [1], [0, 0, 1, 1], [], []>} : vector<16x64xbf16>, vector<64x4xbf16>, vector<16x4xf32> -> vector<16x4xf32>
    %c0_15 = arith.constant 0 : index
    %c0_16 = arith.constant 0 : index
    %19 = vector.load %arg7[%c0_15, %c0_16] : memref<1x4xf32, #tpu.memory_space<vmem>>, vector<1x4xf32>
    %20 = vector.broadcast %19 : vector<1x4xf32> to vector<16x4xf32>
    %21 = arith.addf %18, %20 : vector<16x4xf32>
    %c0_17 = arith.constant 0 : index
    %c0_18 = arith.constant 0 : index
    %22 = vector.load %arg8[%c0_17, %c0_18] : memref<16x4xf32, #tpu.memory_space<vmem>>, vector<16x4xf32>
    tpu.vector_store %arg8[%c0_17, %c0_18], %21 {strides = array<i32>} : memref<16x4xf32, #tpu.memory_space<vmem>>, vector<16x4xf32>,
    return
  }
  func.func @transform_0(%arg0: i32) -> (i32, i32) {
    %c0_i32 = arith.constant 0 : i32
    %c0_i32_0 = arith.constant 0 : i32
    return %arg0, %c0_i32 : i32, i32
  }
  func.func @transform_1(%arg0: i32) -> (i32, i32) {
    %c0_i32 = arith.constant 0 : i32
    %c0_i32_0 = arith.constant 0 : i32
    %c0_i32_1 = arith.constant 0 : i32
    return %c0_i32, %c0_i32_0 : i32, i32
  }
  func.func @transform_2(%arg0: i32) -> (i32, i32) {
    %c0_i32 = arith.constant 0 : i32
    %c0_i32_0 = arith.constant 0 : i32
    %c0_i32_1 = arith.constant 0 : i32
    return %c0_i32, %c0_i32_0 : i32, i32
  }
  func.func @transform_3(%arg0: i32) -> (i32, i32) {
    %c0_i32 = arith.constant 0 : i32
    %c0_i32_0 = arith.constant 0 : i32
    %c0_i32_1 = arith.constant 0 : i32
    return %c0_i32, %c0_i32_0 : i32, i32
  }
  func.func @transform_4(%arg0: i32) -> (i32, i32) {
    %c0_i32 = arith.constant 0 : i32
    %c0_i32_0 = arith.constant 0 : i32
    %c0_i32_1 = arith.constant 0 : i32
    return %c0_i32, %c0_i32_0 : i32, i32
  }
  func.func @transform_5(%arg0: i32) -> (i32, i32) {
    %c0_i32 = arith.constant 0 : i32
    %c0_i32_0 = arith.constant 0 : i32
    %c0_i32_1 = arith.constant 0 : i32
    return %c0_i32, %c0_i32_0 : i32, i32
  }
  func.func @transform_6(%arg0: i32) -> (i32, i32) {
    %c0_i32 = arith.constant 0 : i32
    %c0_i32_0 = arith.constant 0 : i32
    %c0_i32_1 = arith.constant 0 : i32
    return %c0_i32, %c0_i32_0 : i32, i32
  }
  func.func @transform_7(%arg0: i32) -> (i32, i32) {
    %c0_i32 = arith.constant 0 : i32
    %c0_i32_0 = arith.constant 0 : i32
    return %arg0, %c0_i32 : i32, i32
  }
}

module attributes {stable_mosaic.version = 11 : i64} {
  func.func @qnetwork_kernel(%arg0: i32, %arg1: memref<16x16xbf16, #tpu.memory_space<vmem>>, %arg2: memref<16x64xbf16, #tpu.memory_space<vmem>>, %arg3: memref<1x64xf32, #tpu.memory_space<vmem>>, %arg4: memref<64x64xbf16, #tpu.memory_space<vmem>>, %arg5: memref<1x64xf32, #tpu.memory_space<vmem>>, %arg6: memref<64x4xbf16, #tpu.memory_space<vmem>>, %arg7: memref<1x4xf32, #tpu.memory_space<vmem>>, %arg8: memref<16x4xf32, #tpu.memory_space<vmem>>) attributes {dimension_semantics = [#tpu.dimension_semantics<parallel>], iteration_bounds = array<i64: 1>, scalar_prefetch = 0 : i64, scratch_operands = 0 : i64, tpu.core_type = #tpu.core_type<tc>, window_params = [{transform_indices = @transform_0, window_bounds = array<i64: 16, 16>}, {pipeline_mode = #tpu.pipeline_mode<synchronous>, transform_indices = @transform_1, window_bounds = array<i64: 16, 64>}, {pipeline_mode = #tpu.pipeline_mode<synchronous>, transform_indices = @transform_2, window_bounds = array<i64: 1, 64>}, {pipeline_mode = #tpu.pipeline_mode<synchronous>, transform_indices = @transform_3, window_bounds = array<i64: 64, 64>}, {pipeline_mode = #tpu.pipeline_mode<synchronous>, transform_indices = @transform_4, window_bounds = array<i64: 1, 64>}, {pipeline_mode = #tpu.pipeline_mode<synchronous>, transform_indices = @transform_5, window_bounds = array<i64: 64, 4>}, {pipeline_mode = #tpu.pipeline_mode<synchronous>, transform_indices = @transform_6, window_bounds = array<i64: 1, 4>}, {transform_indices = @transform_7, window_bounds = array<i64: 16, 4>}]} {
    %c0 = arith.constant 0 : index
    %c0_0 = arith.constant 0 : index
    %0 = vector.load %arg1[%c0, %c0_0] : memref<16x16xbf16, #tpu.memory_space<vmem>>, vector<16x16xbf16>
    %c0_1 = arith.constant 0 : index
    %c0_2 = arith.constant 0 : index
    %1 = vector.load %arg2[%c0_1, %c0_2] : memref<16x64xbf16, #tpu.memory_space<vmem>>, vector<16x64xbf16>
    %cst = arith.constant dense<0.000000e+00> : vector<16x64xf32>
    %2 = tpu.matmul %0, %1, %cst {dimension_numbers = #tpu.dot_dimension_numbers<[1], [0], [0], [1], [0, 0, 1, 1], [], []>} : vector<16x16xbf16>, vector<16x64xbf16>, vector<16x64xf32> -> vector<16x64xf32>
    %c0_3 = arith.constant 0 : index
    %c0_4 = arith.constant 0 : index
    %3 = vector.load %arg3[%c0_3, %c0_4] : memref<1x64xf32, #tpu.memory_space<vmem>>, vector<1x64xf32>
    %4 = vector.broadcast %3 : vector<1x64xf32> to vector<16x64xf32>
    %5 = arith.addf %2, %4 : vector<16x64xf32>
    %cst_5 = arith.constant 0.000000e+00 : f32
    %6 = vector.broadcast %cst_5 : f32 to vector<16x64xf32>
    %7 = arith.maximumf %5, %6 : vector<16x64xf32>
    %8 = arith.truncf %7 : vector<16x64xf32> to vector<16x64xbf16>
    %c0_6 = arith.constant 0 : index
    %c0_7 = arith.constant 0 : index
    %9 = vector.load %arg4[%c0_6, %c0_7] : memref<64x64xbf16, #tpu.memory_space<vmem>>, vector<64x64xbf16>
    %cst_8 = arith.constant dense<0.000000e+00> : vector<16x64xf32>
    %10 = tpu.matmul %8, %9, %cst_8 {dimension_numbers = #tpu.dot_dimension_numbers<[1], [0], [0], [1], [0, 0, 1, 1], [], []>} : vector<16x64xbf16>, vector<64x64xbf16>, vector<16x64xf32> -> vector<16x64xf32>
    %c0_9 = arith.constant 0 : index
    %c0_10 = arith.constant 0 : index
    %11 = vector.load %arg5[%c0_9, %c0_10] : memref<1x64xf32, #tpu.memory_space<vmem>>, vector<1x64xf32>
    %12 = vector.broadcast %11 : vector<1x64xf32> to vector<16x64xf32>
    %13 = arith.addf %10, %12 : vector<16x64xf32>
    %cst_11 = arith.constant 0.000000e+00 : f32
    %14 = vector.broadcast %cst_11 : f32 to vector<16x64xf32>
    %15 = arith.maximumf %13, %14 : vector<16x64xf32>
    %16 = arith.truncf %15 : vector<16x64xf32> to vector<16x64xbf16>
    %c0_12 = arith.constant 0 : index
    %c0_13 = arith.constant 0 : index
    %17 = vector.load %arg6[%c0_12, %c0_13] : memref<64x4xbf16, #tpu.memory_space<vmem>>, vector<64x4xbf16>
    %cst_14 = arith.constant dense<0.000000e+00> : vector<16x4xf32>
    %18 = tpu.matmul %16, %17, %cst_14 {dimension_numbers = #tpu.dot_dimension_numbers<[1], [0], [0], [1], [0, 0, 1, 1], [], []>} : vector<16x64xbf16>, vector<64x4xbf16>, vector<16x4xf32> -> vector<16x4xf32>
    %c0_15 = arith.constant 0 : index
    %c0_16 = arith.constant 0 : index
    %19 = vector.load %arg7[%c0_15, %c0_16] : memref<1x4xf32, #tpu.memory_space<vmem>>, vector<1x4xf32>
    %20 = vector.broadcast %19 : vector<1x4xf32> to vector<16x4xf32>
    %21 = arith.addf %18, %20 : vector<16x4xf32>
    %c0_17 = arith.constant 0 : index
    %c0_18 = arith.constant 0 : index
    %22 = vector.load %arg8[%c0_17, %c0_18] : memref<16x4xf32, #tpu.memory_space<vmem>>, vector<16x4xf32>
    tpu.vector_store %arg8[%c0_17, %c0_18], %21 {strides = array<i32>} : memref<16x4xf32, #tpu.memory_space<vmem>>, vector<16x4xf32>,
    return
  }
  func.func @transform_0(%arg0: i32) -> (i32, i32) {
    %c0_i32 = arith.constant 0 : i32
    %c0_i32_0 = arith.constant 0 : i32
    return %arg0, %c0_i32 : i32, i32
  }
  func.func @transform_1(%arg0: i32) -> (i32, i32) {
    %c0_i32 = arith.constant 0 : i32
    %c0_i32_0 = arith.constant 0 : i32
    %c0_i32_1 = arith.constant 0 : i32
    return %c0_i32, %c0_i32_0 : i32, i32
  }
  func.func @transform_2(%arg0: i32) -> (i32, i32) {
    %c0_i32 = arith.constant 0 : i32
    %c0_i32_0 = arith.constant 0 : i32
    %c0_i32_1 = arith.constant 0 : i32
    return %c0_i32, %c0_i32_0 : i32, i32
  }
  func.func @transform_3(%arg0: i32) -> (i32, i32) {
    %c0_i32 = arith.constant 0 : i32
    %c0_i32_0 = arith.constant 0 : i32
    %c0_i32_1 = arith.constant 0 : i32
    return %c0_i32, %c0_i32_0 : i32, i32
  }
  func.func @transform_4(%arg0: i32) -> (i32, i32) {
    %c0_i32 = arith.constant 0 : i32
    %c0_i32_0 = arith.constant 0 : i32
    %c0_i32_1 = arith.constant 0 : i32
    return %c0_i32, %c0_i32_0 : i32, i32
  }
  func.func @transform_5(%arg0: i32) -> (i32, i32) {
    %c0_i32 = arith.constant 0 : i32
    %c0_i32_0 = arith.constant 0 : i32
    %c0_i32_1 = arith.constant 0 : i32
    return %c0_i32, %c0_i32_0 : i32, i32
  }
  func.func @transform_6(%arg0: i32) -> (i32, i32) {
    %c0_i32 = arith.constant 0 : i32
    %c0_i32_0 = arith.constant 0 : i32
    %c0_i32_1 = arith.constant 0 : i32
    return %c0_i32, %c0_i32_0 : i32, i32
  }
  func.func @transform_7(%arg0: i32) -> (i32, i32) {
    %c0_i32 = arith.constant 0 : i32
    %c0_i32_0 = arith.constant 0 : i32
    return %arg0, %c0_i32 : i32, i32
  }
}

</mosaic_0001>

<llo_original>
// kernel: tpu_custom_call.1
$region0: #{tpu_custom_call.1}
  #allocation0 [shape = 'u32[]', space=smem, size = 0x4, offset = 0x4, fixed_abs, tag = 'smem constant byte address 0x4 - core index']
  #allocation1 [shape = 'u32[144,128]{1,0:T(1,128)}', space=vmem, size = 0x12000, scoped, tag = 'internal scratch']
  %s0 = inlined_call_operand.hbm [shape: bf16[16,16], index: 0, kind: input, shape index: {}]
  %s1 = inlined_call_operand.hbm [shape: bf16[16,64], index: 1, kind: input, shape index: {}]
  %s2 = inlined_call_operand.vmem [shape: f32[1,64], index: 2, kind: input, shape index: {}]
  %s3 = inlined_call_operand.vmem [shape: bf16[64,64], index: 3, kind: input, shape index: {}]
  %s4 = inlined_call_operand.vmem [shape: f32[1,64], index: 4, kind: input, shape index: {}]
  %s5 = inlined_call_operand.vmem [shape: bf16[64,4], index: 5, kind: input, shape index: {}]
  %s6 = inlined_call_operand.vmem [shape: f32[1,4], index: 6, kind: input, shape index: {}]
  %s7 = inlined_call_operand.vmem [shape: f32[16,4], index: 7, kind: output, shape index: {}]
  %s8 = sld [smem:[#allocation0]]
  $region46: #{tpu_custom_call.1} parent=0
    _
  %s10 = ssub.s32 1, %s8
  %s11 = scalar_select 0, %s10, %s8
  $region1: #{tpu_custom_call.1} parent=0
    #allocation2 [shape = 'u8[4096]{0}', space=vmem, size = 0x1000, scoped, tag = 'input window, operand 0, single buffered']
    #allocation3 [shape = 's32[1]{0}', space=sflag, size = 0x4, scoped, tag = 'scoped memory for tpu_custom_call.1']
    #allocation4 [shape = 'u8[4096]{0}', space=vmem, size = 0x1000, scoped, tag = 'input window, operand 1, single buffered']
    #allocation5 [shape = 's32[1]{0}', space=sflag, size = 0x4, scoped, tag = 'scoped memory for tpu_custom_call.1']
    %12 = vsyncpa [#allocation3], 0
    %13 = vsyncpa [#allocation5], 0
    // Predicated region
    $region2: #{tpu_custom_call.1} parent=1 // pred_check
      _
    $region3: #{tpu_custom_call.1} parent=1 // pred_check_branch
      %15 = sbr.rel (0) target = $region5
    $region4: #{tpu_custom_call.1} parent=1 // pred_region
      %s17 = ssub.s32 128, 128
      %18 = vsyncadd [#allocation3], %s17
      %s19 = sshll.u32 [#allocation2], 4
      %s20 = int_to_ptr.vmem [resolvable:$true] %s19
      %25 = dma.hbm_to_vmem [thread:$0]  %s0, 128, %s20, [#allocation3], 64, 64, 4
    $region5: #{tpu_custom_call.1} parent=1 // pred_fallthru
      _
    // Predicated region
    $region6: #{tpu_custom_call.1} parent=1 // pred_check
      _
    $region7: #{tpu_custom_call.1} parent=1 // pred_check_branch
      %27 = sbr.rel (0) target = $region9
    $region8: #{tpu_custom_call.1} parent=1 // pred_region
      %s29 = ssub.s32 128, 128
      %30 = vsyncadd [#allocation5], %s29
      %s31 = sshll.u32 [#allocation4], 4
      %s32 = int_to_ptr.vmem [resolvable:$true] %s31
      %37 = dma.hbm_to_vmem [thread:$0]  %s1, 128, %s32, [#allocation5], 64, 64, 4
    $region9: #{tpu_custom_call.1} parent=1 // pred_fallthru
      _
    // Predicated region
    $region10: #{tpu_custom_call.1} parent=1 // pred_check
      _
    $region11: #{tpu_custom_call.1} parent=1 // pred_check_branch
      %39 = sbr.rel (0) target = $region13
    $region12: #{tpu_custom_call.1} parent=1 // pred_region
      _
    $region13: #{tpu_custom_call.1} parent=1 // pred_fallthru
      _
    // Predicated region
    $region14: #{tpu_custom_call.1} parent=1 // pred_check
      _
    $region15: #{tpu_custom_call.1} parent=1 // pred_check_branch
      %41 = sbr.rel (0) target = $region17
    $region16: #{tpu_custom_call.1} parent=1 // pred_region
      _
    $region17: #{tpu_custom_call.1} parent=1 // pred_fallthru
      _
    // Predicated region
    $region18: #{tpu_custom_call.1} parent=1 // pred_check
      _
    $region19: #{tpu_custom_call.1} parent=1 // pred_check_branch
      %43 = sbr.rel (0) target = $region21
    $region20: #{tpu_custom_call.1} parent=1 // pred_region
      _
    $region21: #{tpu_custom_call.1} parent=1 // pred_fallthru
      _
    // Predicated region
    $region22: #{tpu_custom_call.1} parent=1 // pred_check
      _
    $region23: #{tpu_custom_call.1} parent=1 // pred_check_branch
      %45 = sbr.rel (0) target = $region25
    $region24: #{tpu_custom_call.1} parent=1 // pred_region
      _
    $region25: #{tpu_custom_call.1} parent=1 // pred_fallthru
      _
    // Predicated region
    $region26: #{tpu_custom_call.1} parent=1 // pred_check
      _
    $region27: #{tpu_custom_call.1} parent=1 // pred_check_branch
      %47 = sbr.rel (0) target = $region29
    $region28: #{tpu_custom_call.1} parent=1 // pred_region
      _
    $region29: #{tpu_custom_call.1} parent=1 // pred_fallthru
      _
    // Predicated region
    $region30: #{tpu_custom_call.1} parent=1 // pred_check
      _
    $region31: #{tpu_custom_call.1} parent=1 // pred_check_branch
      %49 = sbr.rel (0) target = $region33
    $region32: #{tpu_custom_call.1} parent=1 // pred_region
      %50 = dma.done [#allocation3], 128
    $region33: #{tpu_custom_call.1} parent=1 // pred_fallthru
      _
    // Predicated region
    $region34: #{tpu_custom_call.1} parent=1 // pred_check
      _
    $region35: #{tpu_custom_call.1} parent=1 // pred_check_branch
      %52 = sbr.rel (0) target = $region37
    $region36: #{tpu_custom_call.1} parent=1 // pred_region
      %53 = dma.done [#allocation5], 128
    $region37: #{tpu_custom_call.1} parent=1 // pred_fallthru
      _
    %v55 = vld [vmem:[#allocation2] sm:$0xf]
    %v56 = vld [vmem:[#allocation2 + $0x4] sm:$0xf]
    %v57 = vld [vmem:[#allocation4] sm:$0xf]
    %v58 = vld [vmem:[#allocation4 + $0x4] sm:$0xf]
    %v59 = vld [vmem:[%s2] sm:$0x1]
    %v61 = vlaneseq
    %v62 = vshrl.u32 %v61, 7
    %v63 = vsub.s32 0, %v62
    %v64 = vrot.slane %v59, %v63
    %v68 = vunpack.c.l.b16 %v55
    %v69 = vunpack.c.l.b16 %v56
    %v70 = vpack.c.b16 %v69, %v68
    %v73 = vunpack.c.l.b16 %v57
    %v74 = vunpack.c.l.b16 %v58
    %v75 = vpack.c.b16 %v74, %v73
    %vm77 = vcmask 130048
    %v79 = vsel %vm77, %v70, 0
    %81 = vmatprep.subr.bf16.mxu0 0
    %82 = vmatpush1.bf16.msra.mxu0 0
    %83 = vmatprep.subr.bf16.mxu0 0
    %84 = vmatpush1.bf16.msra.mxu0 0
    %85 = vmatprep.subr.bf16.mxu0 0
    %86 = vmatpush1.bf16.msra.mxu0 0
    %87 = vmatprep.subr.bf16.mxu0 0
    %88 = vmatpush1.bf16.msra.mxu0 0
    %89 = vmatprep.subr.bf16.mxu0 0
    %90 = vmatpush1.bf16.msra.mxu0 0
    %91 = vmatprep.subr.bf16.mxu0 0
    %92 = vmatpush1.bf16.msra.mxu0 0
    %93 = vmatprep.subr.bf16.mxu0 0
    %94 = vmatpush1.bf16.msra.mxu0 0
    %95 = vmatprep.subr.bf16.mxu0 0
    %96 = vmatpush1.bf16.msra.mxu0 %v75
    %97 = vmatprep.subr.bf16.mxu0 0
    %98 = vmatpush2.bf16.msra.mxu0 0
    %99 = vmatprep.subr.bf16.mxu0 0
    %100 = vmatpush2.bf16.msra.mxu0 0
    %101 = vmatprep.subr.bf16.mxu0 0
    %102 = vmatpush2.bf16.msra.mxu0 0
    %103 = vmatprep.subr.bf16.mxu0 0
    %104 = vmatpush2.bf16.msra.mxu0 0
    %105 = vmatprep.subr.bf16.mxu0 0
    %106 = vmatpush2.bf16.msra.mxu0 0
    %107 = vmatprep.subr.bf16.mxu0 0
    %108 = vmatpush2.bf16.msra.mxu0 0
    %109 = vmatprep.subr.bf16.mxu0 0
    %110 = vmatpush2.bf16.msra.mxu0 0
    %111 = vmatprep.subr.bf16.mxu0 0
    %112 = vmatpush2.bf16.msra.mxu0 0
    %113 = vmatprep.mubr.bf16.mxu0 0
    %114 = vmatmul.mubr.bf16.gmra.mxu0 %v79
    %v115 = vpop.f32.mrf.mxu0
    %v116 = vadd.f32 %v64, %v115
    %v117 = vpop.f32.mrf.mxu0
    %v118 = vpop.f32.mrf.mxu0
    %v119 = vadd.f32 %v64, %v118
    %v120 = vpop.f32.mrf.mxu0
    %121 = vdwg.mxu0
    %v122 = vmax.f32 %v116, 0.0
    %v123 = vmax.f32 %v119, 0.0
    %v124 = vpack.c.bf16 %v123, %v122
    %v125 = vld [vmem:[%s3] sm:$0xf]
    %v126 = vld [vmem:[%s3 + $0x4] sm:$0xf]
    %v127 = vld [vmem:[%s3 + $0x8] sm:$0xf]
    %v128 = vld [vmem:[%s3 + $0xc] sm:$0xf]
    %v129 = vld [vmem:[%s3 + $0x10] sm:$0xf]
    %v130 = vld [vmem:[%s3 + $0x14] sm:$0xf]
    %v131 = vld [vmem:[%s3 + $0x18] sm:$0xf]
    %v132 = vld [vmem:[%s3 + $0x1c] sm:$0xf]
    %v133 = vld [vmem:[%s4] sm:$0x1]
    %v135 = vlaneseq
    %v136 = vshrl.u32 %v135, 7
    %v137 = vsub.s32 0, %v136
    %v138 = vrot.slane %v133, %v137
    %v148 = vunpack.c.l.b16 %v125
    %v149 = vunpack.c.l.b16 %v126
    %v150 = vunpack.c.l.b16 %v127
    %v151 = vunpack.c.l.b16 %v128
    %v152 = vunpack.c.l.b16 %v129
    %v153 = vunpack.c.l.b16 %v130
    %v154 = vunpack.c.l.b16 %v131
    %v155 = vunpack.c.l.b16 %v132
    %v156 = vpack.c.b16 %v149, %v148
    %v157 = vpack.c.b16 %v151, %v150
    %v158 = vpack.c.b16 %v153, %v152
    %v159 = vpack.c.b16 %v155, %v154
    %vm164 = vcmask 523264
    %v166 = vsel %vm164, %v124, 0
    %168 = vmatprep.subr.bf16.mxu0 0
    %169 = vmatpush1.bf16.msra.mxu0 0
    %170 = vmatprep.subr.bf16.mxu0 0
    %171 = vmatpush1.bf16.msra.mxu0 0
    %172 = vmatprep.subr.bf16.mxu0 0
    %173 = vmatpush1.bf16.msra.mxu0 0
    %174 = vmatprep.subr.bf16.mxu0 0
    %175 = vmatpush1.bf16.msra.mxu0 0
    %176 = vmatprep.subr.bf16.mxu0 0
    %177 = vmatpush1.bf16.msra.mxu0 %v159
    %178 = vmatprep.subr.bf16.mxu0 0
    %179 = vmatpush1.bf16.msra.mxu0 %v158
    %180 = vmatprep.subr.bf16.mxu0 0
    %181 = vmatpush1.bf16.msra.mxu0 %v157
    %182 = vmatprep.subr.bf16.mxu0 0
    %183 = vmatpush1.bf16.msra.mxu0 %v156
    %184 = vmatprep.subr.bf16.mxu0 0
    %185 = vmatpush2.bf16.msra.mxu0 0
    %186 = vmatprep.subr.bf16.mxu0 0
    %187 = vmatpush2.bf16.msra.mxu0 0
    %188 = vmatprep.subr.bf16.mxu0 0
    %189 = vmatpush2.bf16.msra.mxu0 0
    %190 = vmatprep.subr.bf16.mxu0 0
    %191 = vmatpush2.bf16.msra.mxu0 0
    %192 = vmatprep.subr.bf16.mxu0 0
    %193 = vmatpush2.bf16.msra.mxu0 0
    %194 = vmatprep.subr.bf16.mxu0 0
    %195 = vmatpush2.bf16.msra.mxu0 0
    %196 = vmatprep.subr.bf16.mxu0 0
    %197 = vmatpush2.bf16.msra.mxu0 0
    %198 = vmatprep.subr.bf16.mxu0 0
    %199 = vmatpush2.bf16.msra.mxu0 0
    %200 = vmatprep.mubr.bf16.mxu0 0
    %201 = vmatmul.mubr.bf16.gmra.mxu0 %v166
    %v202 = vpop.f32.mrf.mxu0
    %v203 = vadd.f32 %v138, %v202
    %v204 = vpop.f32.mrf.mxu0
    %v205 = vpop.f32.mrf.mxu0
    %v206 = vadd.f32 %v138, %v205
    %v207 = vpop.f32.mrf.mxu0
    %208 = vdwg.mxu0
    %v209 = vmax.f32 %v203, 0.0
    %v210 = vmax.f32 %v206, 0.0
    %v211 = vpack.c.bf16 %v210, %v209
    %v212 = vld [vmem:[%s5] sm:$0xf]
    %v213 = vld [vmem:[%s5 + $0x4] sm:$0xf]
    %v214 = vld [vmem:[%s5 + $0x8] sm:$0xf]
    %v215 = vld [vmem:[%s5 + $0xc] sm:$0xf]
    %v216 = vld [vmem:[%s5 + $0x10] sm:$0xf]
    %v217 = vld [vmem:[%s5 + $0x14] sm:$0xf]
    %v218 = vld [vmem:[%s5 + $0x18] sm:$0xf]
    %v219 = vld [vmem:[%s5 + $0x1c] sm:$0xf]
    %v220 = vld [vmem:[%s6] sm:$0x1]
    %v222 = vlaneseq
    %v223 = vshrl.u32 %v222, 7
    %v224 = vsub.s32 0, %v223
    %v225 = vrot.slane %v220, %v224
    %v235 = vunpack.c.l.b16 %v212
    %v236 = vunpack.c.l.b16 %v213
    %v237 = vunpack.c.l.b16 %v214
    %v238 = vunpack.c.l.b16 %v215
    %v239 = vunpack.c.l.b16 %v216
    %v240 = vunpack.c.l.b16 %v217
    %v241 = vunpack.c.l.b16 %v218
    %v242 = vunpack.c.l.b16 %v219
    %v243 = vpack.c.b16 %v236, %v235
    %v244 = vpack.c.b16 %v238, %v237
    %v245 = vpack.c.b16 %v240, %v239
    %v246 = vpack.c.b16 %v242, %v241
    %v252 = vsel %vm164, %v211, 0
    %254 = vmatprep.subr.bf16.mxu0 0
    %255 = vmatpush1.bf16.msra.mxu0 0
    %256 = vmatprep.subr.bf16.mxu0 0
    %257 = vmatpush1.bf16.msra.mxu0 0
    %258 = vmatprep.subr.bf16.mxu0 0
    %259 = vmatpush1.bf16.msra.mxu0 0
    %260 = vmatprep.subr.bf16.mxu0 0
    %261 = vmatpush1.bf16.msra.mxu0 0
    %262 = vmatprep.subr.bf16.mxu0 0
    %263 = vmatpush1.bf16.msra.mxu0 %v246
    %264 = vmatprep.subr.bf16.mxu0 0
    %265 = vmatpush1.bf16.msra.mxu0 %v245
    %266 = vmatprep.subr.bf16.mxu0 0
    %267 = vmatpush1.bf16.msra.mxu0 %v244
    %268 = vmatprep.subr.bf16.mxu0 0
    %269 = vmatpush1.bf16.msra.mxu0 %v243
    %270 = vmatprep.subr.bf16.mxu0 0
    %271 = vmatpush2.bf16.msra.mxu0 0
    %272 = vmatprep.subr.bf16.mxu0 0
    %273 = vmatpush2.bf16.msra.mxu0 0
    %274 = vmatprep.subr.bf16.mxu0 0
    %275 = vmatpush2.bf16.msra.mxu0 0
    %276 = vmatprep.subr.bf16.mxu0 0
    %277 = vmatpush2.bf16.msra.mxu0 0
    %278 = vmatprep.subr.bf16.mxu0 0
    %279 = vmatpush2.bf16.msra.mxu0 0
    %280 = vmatprep.subr.bf16.mxu0 0
    %281 = vmatpush2.bf16.msra.mxu0 0
    %282 = vmatprep.subr.bf16.mxu0 0
    %283 = vmatpush2.bf16.msra.mxu0 0
    %284 = vmatprep.subr.bf16.mxu0 0
    %285 = vmatpush2.bf16.msra.mxu0 0
    %286 = vmatprep.mubr.bf16.mxu0 0
    %287 = vmatmul.mubr.bf16.gmra.mxu0 %v252
    %v288 = vpop.f32.mrf.mxu0
    %v289 = vadd.f32 %v225, %v288
    %v290 = vpop.f32.mrf.mxu0
    %v291 = vpop.f32.mrf.mxu0
    %v292 = vadd.f32 %v225, %v291
    %v293 = vpop.f32.mrf.mxu0
    %294 = vdwg.mxu0
    %vm295 = vcmask 31744
    %296 = vst.msk [vmem:[%s7] sm:$0xff] %vm295, %v289
    %297 = vst.msk [vmem:[%s7 + $0x8] sm:$0xff] %vm295, %v292
    // Predicated region
    $region38: #{tpu_custom_call.1} parent=1 // pred_check
      _
    $region39: #{tpu_custom_call.1} parent=1 // pred_check_branch
      %299 = sbr.rel (0) target = $region41
    $region40: #{tpu_custom_call.1} parent=1 // pred_region
      _
    $region41: #{tpu_custom_call.1} parent=1 // pred_fallthru
      _
    // Predicated region
    $region42: #{tpu_custom_call.1} parent=1 // pred_check
      _
    $region43: #{tpu_custom_call.1} parent=1 // pred_check_branch
      %301 = sbr.rel (0) target = $region45
    $region44: #{tpu_custom_call.1} parent=1 // pred_region
      _
    $region45: #{tpu_custom_call.1} parent=1 // pred_fallthru
      _
    %302 = vsyncpa [#allocation3], 1
    %303 = vsyncpa [#allocation5], 1

// kernel: tpu_custom_call.1
$region0: #{tpu_custom_call.1}
  #allocation0 [shape = 'u32[]', space=smem, size = 0x4, offset = 0x4, fixed_abs, tag = 'smem constant byte address 0x4 - core index']
  #allocation1 [shape = 'u32[144,128]{1,0:T(1,128)}', space=vmem, size = 0x12000, scoped, tag = 'internal scratch']
  %s0 = inlined_call_operand.hbm [shape: bf16[16,16], index: 0, kind: input, shape index: {}]
  %s1 = inlined_call_operand.hbm [shape: bf16[16,64], index: 1, kind: input, shape index: {}]
  %s2 = inlined_call_operand.vmem [shape: f32[1,64], index: 2, kind: input, shape index: {}]
  %s3 = inlined_call_operand.vmem [shape: bf16[64,64], index: 3, kind: input, shape index: {}]
  %s4 = inlined_call_operand.vmem [shape: f32[1,64], index: 4, kind: input, shape index: {}]
  %s5 = inlined_call_operand.vmem [shape: bf16[64,4], index: 5, kind: input, shape index: {}]
  %s6 = inlined_call_operand.vmem [shape: f32[1,4], index: 6, kind: input, shape index: {}]
  %s7 = inlined_call_operand.vmem [shape: f32[16,4], index: 7, kind: output, shape index: {}]
  %s8 = sld [smem:[#allocation0]]
  $region46: #{tpu_custom_call.1} parent=0
    _
  %s10 = ssub.s32 1, %s8
  %s11 = scalar_select 0, %s10, %s8
  $region1: #{tpu_custom_call.1} parent=0
    #allocation2 [shape = 'u8[4096]{0}', space=vmem, size = 0x1000, scoped, tag = 'input window, operand 0, single buffered']
    #allocation3 [shape = 's32[1]{0}', space=sflag, size = 0x4, scoped, tag = 'scoped memory for tpu_custom_call.1']
    #allocation4 [shape = 'u8[4096]{0}', space=vmem, size = 0x1000, scoped, tag = 'input window, operand 1, single buffered']
    #allocation5 [shape = 's32[1]{0}', space=sflag, size = 0x4, scoped, tag = 'scoped memory for tpu_custom_call.1']
    %12 = vsyncpa [#allocation3], 0
    %13 = vsyncpa [#allocation5], 0
    // Predicated region
    $region2: #{tpu_custom_call.1} parent=1 // pred_check
      _
    $region3: #{tpu_custom_call.1} parent=1 // pred_check_branch
      %15 = sbr.rel (0) target = $region5
    $region4: #{tpu_custom_call.1} parent=1 // pred_region
      %s17 = ssub.s32 128, 128
      %18 = vsyncadd [#allocation3], %s17
      %s19 = sshll.u32 [#allocation2], 4
      %s20 = int_to_ptr.vmem [resolvable:$true] %s19
      %25 = dma.hbm_to_vmem [thread:$0]  %s0, 128, %s20, [#allocation3], 64, 64, 4
    $region5: #{tpu_custom_call.1} parent=1 // pred_fallthru
      _
    // Predicated region
    $region6: #{tpu_custom_call.1} parent=1 // pred_check
      _
    $region7: #{tpu_custom_call.1} parent=1 // pred_check_branch
      %27 = sbr.rel (0) target = $region9
    $region8: #{tpu_custom_call.1} parent=1 // pred_region
      %s29 = ssub.s32 128, 128
      %30 = vsyncadd [#allocation5], %s29
      %s31 = sshll.u32 [#allocation4], 4
      %s32 = int_to_ptr.vmem [resolvable:$true] %s31
      %37 = dma.hbm_to_vmem [thread:$0]  %s1, 128, %s32, [#allocation5], 64, 64, 4
    $region9: #{tpu_custom_call.1} parent=1 // pred_fallthru
      _
    // Predicated region
    $region10: #{tpu_custom_call.1} parent=1 // pred_check
      _
    $region11: #{tpu_custom_call.1} parent=1 // pred_check_branch
      %39 = sbr.rel (0) target = $region13
    $region12: #{tpu_custom_call.1} parent=1 // pred_region
      _
    $region13: #{tpu_custom_call.1} parent=1 // pred_fallthru
      _
    // Predicated region
    $region14: #{tpu_custom_call.1} parent=1 // pred_check
      _
    $region15: #{tpu_custom_call.1} parent=1 // pred_check_branch
      %41 = sbr.rel (0) target = $region17
    $region16: #{tpu_custom_call.1} parent=1 // pred_region
      _
    $region17: #{tpu_custom_call.1} parent=1 // pred_fallthru
      _
    // Predicated region
    $region18: #{tpu_custom_call.1} parent=1 // pred_check
      _
    $region19: #{tpu_custom_call.1} parent=1 // pred_check_branch
      %43 = sbr.rel (0) target = $region21
    $region20: #{tpu_custom_call.1} parent=1 // pred_region
      _
    $region21: #{tpu_custom_call.1} parent=1 // pred_fallthru
      _
    // Predicated region
    $region22: #{tpu_custom_call.1} parent=1 // pred_check
      _
    $region23: #{tpu_custom_call.1} parent=1 // pred_check_branch
      %45 = sbr.rel (0) target = $region25
    $region24: #{tpu_custom_call.1} parent=1 // pred_region
      _
    $region25: #{tpu_custom_call.1} parent=1 // pred_fallthru
      _
    // Predicated region
    $region26: #{tpu_custom_call.1} parent=1 // pred_check
      _
    $region27: #{tpu_custom_call.1} parent=1 // pred_check_branch
      %47 = sbr.rel (0) target = $region29
    $region28: #{tpu_custom_call.1} parent=1 // pred_region
      _
    $region29: #{tpu_custom_call.1} parent=1 // pred_fallthru
      _
    // Predicated region
    $region30: #{tpu_custom_call.1} parent=1 // pred_check
      _
    $region31: #{tpu_custom_call.1} parent=1 // pred_check_branch
      %49 = sbr.rel (0) target = $region33
    $region32: #{tpu_custom_call.1} parent=1 // pred_region
      %50 = dma.done [#allocation3], 128
    $region33: #{tpu_custom_call.1} parent=1 // pred_fallthru
      _
    // Predicated region
    $region34: #{tpu_custom_call.1} parent=1 // pred_check
      _
    $region35: #{tpu_custom_call.1} parent=1 // pred_check_branch
      %52 = sbr.rel (0) target = $region37
    $region36: #{tpu_custom_call.1} parent=1 // pred_region
      %53 = dma.done [#allocation5], 128
    $region37: #{tpu_custom_call.1} parent=1 // pred_fallthru
      _
    %v55 = vld [vmem:[#allocation2] sm:$0xf]
    %v56 = vld [vmem:[#allocation2 + $0x4] sm:$0xf]
    %v57 = vld [vmem:[#allocation4] sm:$0xf]
    %v58 = vld [vmem:[#allocation4 + $0x4] sm:$0xf]
    %v59 = vld [vmem:[%s2] sm:$0x1]
    %v61 = vlaneseq
    %v62 = vshrl.u32 %v61, 7
    %v63 = vsub.s32 0, %v62
    %v64 = vrot.slane %v59, %v63
    %v68 = vunpack.c.l.b16 %v55
    %v69 = vunpack.c.l.b16 %v56
    %v70 = vpack.c.b16 %v69, %v68
    %v73 = vunpack.c.l.b16 %v57
    %v74 = vunpack.c.l.b16 %v58
    %v75 = vpack.c.b16 %v74, %v73
    %vm77 = vcmask 130048
    %v79 = vsel %vm77, %v70, 0
    %81 = vmatprep.subr.bf16.mxu0 0
    %82 = vmatpush1.bf16.msra.mxu0 0
    %83 = vmatprep.subr.bf16.mxu0 0
    %84 = vmatpush1.bf16.msra.mxu0 0
    %85 = vmatprep.subr.bf16.mxu0 0
    %86 = vmatpush1.bf16.msra.mxu0 0
    %87 = vmatprep.subr.bf16.mxu0 0
    %88 = vmatpush1.bf16.msra.mxu0 0
    %89 = vmatprep.subr.bf16.mxu0 0
    %90 = vmatpush1.bf16.msra.mxu0 0
    %91 = vmatprep.subr.bf16.mxu0 0
    %92 = vmatpush1.bf16.msra.mxu0 0
    %93 = vmatprep.subr.bf16.mxu0 0
    %94 = vmatpush1.bf16.msra.mxu0 0
    %95 = vmatprep.subr.bf16.mxu0 0
    %96 = vmatpush1.bf16.msra.mxu0 %v75
    %97 = vmatprep.subr.bf16.mxu0 0
    %98 = vmatpush2.bf16.msra.mxu0 0
    %99 = vmatprep.subr.bf16.mxu0 0
    %100 = vmatpush2.bf16.msra.mxu0 0
    %101 = vmatprep.subr.bf16.mxu0 0
    %102 = vmatpush2.bf16.msra.mxu0 0
    %103 = vmatprep.subr.bf16.mxu0 0
    %104 = vmatpush2.bf16.msra.mxu0 0
    %105 = vmatprep.subr.bf16.mxu0 0
    %106 = vmatpush2.bf16.msra.mxu0 0
    %107 = vmatprep.subr.bf16.mxu0 0
    %108 = vmatpush2.bf16.msra.mxu0 0
    %109 = vmatprep.subr.bf16.mxu0 0
    %110 = vmatpush2.bf16.msra.mxu0 0
    %111 = vmatprep.subr.bf16.mxu0 0
    %112 = vmatpush2.bf16.msra.mxu0 0
    %113 = vmatprep.mubr.bf16.mxu0 0
    %114 = vmatmul.mubr.bf16.gmra.mxu0 %v79
    %v115 = vpop.f32.mrf.mxu0
    %v116 = vadd.f32 %v64, %v115
    %v117 = vpop.f32.mrf.mxu0
    %v118 = vpop.f32.mrf.mxu0
    %v119 = vadd.f32 %v64, %v118
    %v120 = vpop.f32.mrf.mxu0
    %121 = vdwg.mxu0
    %v122 = vmax.f32 %v116, 0.0
    %v123 = vmax.f32 %v119, 0.0
    %v124 = vpack.c.bf16 %v123, %v122
    %v125 = vld [vmem:[%s3] sm:$0xf]
    %v126 = vld [vmem:[%s3 + $0x4] sm:$0xf]
    %v127 = vld [vmem:[%s3 + $0x8] sm:$0xf]
    %v128 = vld [vmem:[%s3 + $0xc] sm:$0xf]
    %v129 = vld [vmem:[%s3 + $0x10] sm:$0xf]
    %v130 = vld [vmem:[%s3 + $0x14] sm:$0xf]
    %v131 = vld [vmem:[%s3 + $0x18] sm:$0xf]
    %v132 = vld [vmem:[%s3 + $0x1c] sm:$0xf]
    %v133 = vld [vmem:[%s4] sm:$0x1]
    %v135 = vlaneseq
    %v136 = vshrl.u32 %v135, 7
    %v137 = vsub.s32 0, %v136
    %v138 = vrot.slane %v133, %v137
    %v148 = vunpack.c.l.b16 %v125
    %v149 = vunpack.c.l.b16 %v126
    %v150 = vunpack.c.l.b16 %v127
    %v151 = vunpack.c.l.b16 %v128
    %v152 = vunpack.c.l.b16 %v129
    %v153 = vunpack.c.l.b16 %v130
    %v154 = vunpack.c.l.b16 %v131
    %v155 = vunpack.c.l.b16 %v132
    %v156 = vpack.c.b16 %v149, %v148
    %v157 = vpack.c.b16 %v151, %v150
    %v158 = vpack.c.b16 %v153, %v152
    %v159 = vpack.c.b16 %v155, %v154
    %vm164 = vcmask 523264
    %v166 = vsel %vm164, %v124, 0
    %168 = vmatprep.subr.bf16.mxu0 0
    %169 = vmatpush1.bf16.msra.mxu0 0
    %170 = vmatprep.subr.bf16.mxu0 0
    %171 = vmatpush1.bf16.msra.mxu0 0
    %172 = vmatprep.subr.bf16.mxu0 0
    %173 = vmatpush1.bf16.msra.mxu0 0
    %174 = vmatprep.subr.bf16.mxu0 0
    %175 = vmatpush1.bf16.msra.mxu0 0
    %176 = vmatprep.subr.bf16.mxu0 0
    %177 = vmatpush1.bf16.msra.mxu0 %v159
    %178 = vmatprep.subr.bf16.mxu0 0
    %179 = vmatpush1.bf16.msra.mxu0 %v158
    %180 = vmatprep.subr.bf16.mxu0 0
    %181 = vmatpush1.bf16.msra.mxu0 %v157
    %182 = vmatprep.subr.bf16.mxu0 0
    %183 = vmatpush1.bf16.msra.mxu0 %v156
    %184 = vmatprep.subr.bf16.mxu0 0
    %185 = vmatpush2.bf16.msra.mxu0 0
    %186 = vmatprep.subr.bf16.mxu0 0
    %187 = vmatpush2.bf16.msra.mxu0 0
    %188 = vmatprep.subr.bf16.mxu0 0
    %189 = vmatpush2.bf16.msra.mxu0 0
    %190 = vmatprep.subr.bf16.mxu0 0
    %191 = vmatpush2.bf16.msra.mxu0 0
    %192 = vmatprep.subr.bf16.mxu0 0
    %193 = vmatpush2.bf16.msra.mxu0 0
    %194 = vmatprep.subr.bf16.mxu0 0
    %195 = vmatpush2.bf16.msra.mxu0 0
    %196 = vmatprep.subr.bf16.mxu0 0
    %197 = vmatpush2.bf16.msra.mxu0 0
    %198 = vmatprep.subr.bf16.mxu0 0
    %199 = vmatpush2.bf16.msra.mxu0 0
    %200 = vmatprep.mubr.bf16.mxu0 0
    %201 = vmatmul.mubr.bf16.gmra.mxu0 %v166
    %v202 = vpop.f32.mrf.mxu0
    %v203 = vadd.f32 %v138, %v202
    %v204 = vpop.f32.mrf.mxu0
    %v205 = vpop.f32.mrf.mxu0
    %v206 = vadd.f32 %v138, %v205
    %v207 = vpop.f32.mrf.mxu0
    %208 = vdwg.mxu0
    %v209 = vmax.f32 %v203, 0.0
    %v210 = vmax.f32 %v206, 0.0
    %v211 = vpack.c.bf16 %v210, %v209
    %v212 = vld [vmem:[%s5] sm:$0xf]
    %v213 = vld [vmem:[%s5 + $0x4] sm:$0xf]
    %v214 = vld [vmem:[%s5 + $0x8] sm:$0xf]
    %v215 = vld [vmem:[%s5 + $0xc] sm:$0xf]
    %v216 = vld [vmem:[%s5 + $0x10] sm:$0xf]
    %v217 = vld [vmem:[%s5 + $0x14] sm:$0xf]
    %v218 = vld [vmem:[%s5 + $0x18] sm:$0xf]
    %v219 = vld [vmem:[%s5 + $0x1c] sm:$0xf]
    %v220 = vld [vmem:[%s6] sm:$0x1]
    %v222 = vlaneseq
    %v223 = vshrl.u32 %v222, 7
    %v224 = vsub.s32 0, %v223
    %v225 = vrot.slane %v220, %v224
    %v235 = vunpack.c.l.b16 %v212
    %v236 = vunpack.c.l.b16 %v213
    %v237 = vunpack.c.l.b16 %v214
    %v238 = vunpack.c.l.b16 %v215
    %v239 = vunpack.c.l.b16 %v216
    %v240 = vunpack.c.l.b16 %v217
    %v241 = vunpack.c.l.b16 %v218
    %v242 = vunpack.c.l.b16 %v219
    %v243 = vpack.c.b16 %v236, %v235
    %v244 = vpack.c.b16 %v238, %v237
    %v245 = vpack.c.b16 %v240, %v239
    %v246 = vpack.c.b16 %v242, %v241
    %v252 = vsel %vm164, %v211, 0
    %254 = vmatprep.subr.bf16.mxu0 0
    %255 = vmatpush1.bf16.msra.mxu0 0
    %256 = vmatprep.subr.bf16.mxu0 0
    %257 = vmatpush1.bf16.msra.mxu0 0
    %258 = vmatprep.subr.bf16.mxu0 0
    %259 = vmatpush1.bf16.msra.mxu0 0
    %260 = vmatprep.subr.bf16.mxu0 0
    %261 = vmatpush1.bf16.msra.mxu0 0
    %262 = vmatprep.subr.bf16.mxu0 0
    %263 = vmatpush1.bf16.msra.mxu0 %v246
    %264 = vmatprep.subr.bf16.mxu0 0
    %265 = vmatpush1.bf16.msra.mxu0 %v245
    %266 = vmatprep.subr.bf16.mxu0 0
    %267 = vmatpush1.bf16.msra.mxu0 %v244
    %268 = vmatprep.subr.bf16.mxu0 0
    %269 = vmatpush1.bf16.msra.mxu0 %v243
    %270 = vmatprep.subr.bf16.mxu0 0
    %271 = vmatpush2.bf16.msra.mxu0 0
    %272 = vmatprep.subr.bf16.mxu0 0
    %273 = vmatpush2.bf16.msra.mxu0 0
    %274 = vmatprep.subr.bf16.mxu0 0
    %275 = vmatpush2.bf16.msra.mxu0 0
    %276 = vmatprep.subr.bf16.mxu0 0
    %277 = vmatpush2.bf16.msra.mxu0 0
    %278 = vmatprep.subr.bf16.mxu0 0
    %279 = vmatpush2.bf16.msra.mxu0 0
    %280 = vmatprep.subr.bf16.mxu0 0
    %281 = vmatpush2.bf16.msra.mxu0 0
    %282 = vmatprep.subr.bf16.mxu0 0
    %283 = vmatpush2.bf16.msra.mxu0 0
    %284 = vmatprep.subr.bf16.mxu0 0
    %285 = vmatpush2.bf16.msra.mxu0 0
    %286 = vmatprep.mubr.bf16.mxu0 0
    %287 = vmatmul.mubr.bf16.gmra.mxu0 %v252
    %v288 = vpop.f32.mrf.mxu0
    %v289 = vadd.f32 %v225, %v288
    %v290 = vpop.f32.mrf.mxu0
    %v291 = vpop.f32.mrf.mxu0
    %v292 = vadd.f32 %v225, %v291
    %v293 = vpop.f32.mrf.mxu0
    %294 = vdwg.mxu0
    %vm295 = vcmask 31744
    %296 = vst.msk [vmem:[%s7] sm:$0xff] %vm295, %v289
    %297 = vst.msk [vmem:[%s7 + $0x8] sm:$0xff] %vm295, %v292
    // Predicated region
    $region38: #{tpu_custom_call.1} parent=1 // pred_check
      _
    $region39: #{tpu_custom_call.1} parent=1 // pred_check_branch
      %299 = sbr.rel (0) target = $region41
    $region40: #{tpu_custom_call.1} parent=1 // pred_region
      _
    $region41: #{tpu_custom_call.1} parent=1 // pred_fallthru
      _
    // Predicated region
    $region42: #{tpu_custom_call.1} parent=1 // pred_check
      _
    $region43: #{tpu_custom_call.1} parent=1 // pred_check_branch
      %301 = sbr.rel (0) target = $region45
    $region44: #{tpu_custom_call.1} parent=1 // pred_region
      _
    $region45: #{tpu_custom_call.1} parent=1 // pred_fallthru
      _
    %302 = vsyncpa [#allocation3], 1
    %303 = vsyncpa [#allocation5], 1

</llo_original>
